<compile_context>
chip_gen: v5e
topology: v5e:2x2
jax: 0.10.0
libtpu: 0.0.40
codegen_flags: <defaults>
</compile_context>

<pallas_src>
import functools

import jax
import jax.numpy as jnp
from jax.experimental import pallas as pl
from jax.experimental.pallas import tpu as pltpu


# ~4 MiB (f32-equivalent) per block.  2(in)+2(out) double-buffered blocks plus
# the in-kernel f32 temporaries (~2-3 blocks worth) stay inside the 48 MiB
# scoped-VMEM limit requested below (v7x physical VMEM is 64 MiB/TC; v5e/v6e
# have 128 MiB but v5e's *default* scoped limit is only 16 MiB, hence the
# explicit limit instead of shrinking blocks).
_TARGET_BLOCK_BYTES = 4 * 1024 * 1024
_VMEM_BLOCK_CAP_BYTES = 6 * 1024 * 1024   # cap on the sublane-padded per-buffer footprint
_VMEM_LIMIT_BYTES = 48 * 1024 * 1024
# Keep >= this many grid steps when the shape allows it (pipelining + megacore).
_MIN_GRID_STEPS = 4


def _compiler_params(n_parallel_axes):
    return pltpu.CompilerParams(
        dimension_semantics=("parallel",) * n_parallel_axes,
        vmem_limit_bytes=_VMEM_LIMIT_BYTES,
    )


def _sublane_align(dtype):
    # 8 rows for 32-bit, 16 for bf16, 32 for 8-bit (sublane packing).
    return max(8, 32 // jnp.dtype(dtype).itemsize)


def _budget_itemsize(dtype):
    # Budget in f32-equivalent bytes: the kernels upcast to f32 internally, so
    # the dominant VMEM temporaries are 4 bytes/element regardless of I/O dtype.
    return max(4, jnp.dtype(dtype).itemsize)


def _row_tile(M, row_bytes, align):
    """Row tile: multiple of `align`, ~_TARGET_BLOCK_BYTES per block, and small
    enough that the grid keeps >= _MIN_GRID_STEPS steps when M allows it."""
    if M <= align:
        return M                                      # full extent: always legal
    padded = pl.cdiv(M, align) * align
    tm = max(align, (_TARGET_BLOCK_BYTES // max(row_bytes, 1)) // align * align)
    cap = max(align, pl.cdiv(pl.cdiv(M, _MIN_GRID_STEPS), align) * align)
    return min(tm, cap, padded)


# ---------------------------------------------------------------------------
# Kernels
# ---------------------------------------------------------------------------

def _ln_rows_kernel(x_ref, w_ref, b_ref, o_ref, *, eps):
    """LayerNorm over the last (lane) axis of a (tm, C) tile."""
    x = x_ref[...].astype(jnp.float32)
    m1 = jnp.mean(x, axis=-1, keepdims=True)
    m2 = jnp.mean(x * x, axis=-1, keepdims=True)
    var = m2 - m1 * m1                                 # single-pass (biased) variance
    y = (x - m1) * jax.lax.rsqrt(var + eps)
    y = y * w_ref[...].astype(jnp.float32) + b_ref[...].astype(jnp.float32)
    o_ref[...] = y.astype(o_ref.dtype)


def _ln_packed_kernel(x_ref, w_ref, b_ref, bd_ref, o_ref, *, eps, inv_c):
    """LayerNorm for small C packed lane-dense: each 128-lane row holds 128//C
    independent length-C groups.  Group sums via a block-diagonal matmul on the
    MXU (free slot for a mem-bound kernel).  `bd` is hoisted to the wrapper and
    DMA'd once (constant index_map).

    Precision note (deliberate): both dots keep f32 operands with an f32
    accumulator; Mosaic's f32 MXU matmul is multi-pass and matches the pure-f32
    reference to <1e-4 (verified).  # TODO(synk): if the MXU ever becomes the
    critical unit on v5e, split x into hi/lo bf16 halves for 2 fast bf16 passes.
    """
    x = x_ref[...].astype(jnp.float32)
    bd = bd_ref[...]                                   # (W, W) block-diagonal 0/1, f32
    s1 = jnp.dot(x, bd, preferred_element_type=jnp.float32)
    s2 = jnp.dot(x * x, bd, preferred_element_type=jnp.float32)
    u = s1 * inv_c
    var = s2 * inv_c - u * u                           # single-pass variance
    y = (x - u) * jax.lax.rsqrt(var + eps)
    y = y * w_ref[...].astype(jnp.float32) + b_ref[...].astype(jnp.float32)
    o_ref[...] = y.astype(o_ref.dtype)


def _ln_nchw_kernel(x_ref, w_ref, b_ref, o_ref, *, eps):
    """NCHW-native LayerNorm: x tile is (1, C, TL); reduce over the channel
    (sublane) axis so the spatial axis stays lane-dense."""
    x = x_ref[...].astype(jnp.float32)
    m1 = jnp.mean(x, axis=1, keepdims=True)
    m2 = jnp.mean(x * x, axis=1, keepdims=True)
    var = m2 - m1 * m1                                 # single-pass variance
    y = (x - m1) * jax.lax.rsqrt(var + eps)
    y = y * w_ref[...].astype(jnp.float32) + b_ref[...].astype(jnp.float32)
    o_ref[...] = y.astype(o_ref.dtype)


# ---------------------------------------------------------------------------
# Wrappers
# ---------------------------------------------------------------------------

def _layer_norm_rows_packed(x2d, weight, bias, eps):
    """Lane-dense path for C dividing 128: fold g=128//C rows into one 128-lane row."""
    M, C = x2d.shape
    g = 128 // C
    W = 128
    align = _sublane_align(x2d.dtype)
    bsize = _budget_itemsize(x2d.dtype)

    pad = (-M) % g
    if pad:
        # TODO(synk): this pad (and the matching slice below) costs one extra
        # HBM round trip of x/y, but is still far cheaper than running (M, C)
        # rows directly with ~97% masked lanes.
        x2d = jnp.pad(x2d, ((0, pad), (0, 0)))
    Mp = (M + pad) // g
    xp = x2d.reshape(Mp, W)                            # free row-major view
    wp = jnp.tile(weight, g).reshape(1, W)
    bp = jnp.tile(bias, g).reshape(1, W)

    # Block-diagonal group-sum matrix, built once (hoisted out of the kernel).
    lane = jnp.arange(W, dtype=jnp.int32)
    bd = (lane[:, None] // C == lane[None, :] // C).astype(jnp.float32)

    tm = _row_tile(Mp, W * bsize, align)
    grid = (pl.cdiv(Mp, tm),)
    kernel = functools.partial(_ln_packed_kernel, eps=eps, inv_c=1.0 / C)
    out = pl.pallas_call(
        kernel,
        out_shape=jax.ShapeDtypeStruct((Mp, W), x2d.dtype),
        grid_spec=pltpu.PrefetchScalarGridSpec(
            num_scalar_prefetch=0,
            grid=grid,
            in_specs=[
                pl.BlockSpec((tm, W), lambda i: (i, 0)),
                pl.BlockSpec((1, W), lambda i: (0, 0)),
                pl.BlockSpec((1, W), lambda i: (0, 0)),
                pl.BlockSpec((W, W), lambda i: (0, 0)),   # constant: fetched once
            ],
            out_specs=pl.BlockSpec((tm, W), lambda i: (i, 0)),
        ),
        compiler_params=_compiler_params(1),
    )(xp, wp, bp, bd)
    out = out.reshape(-1, C)
    if pad:
        out = out[:M]
    return out


def _layer_norm_rows(x2d, weight, bias, eps):
    """LayerNorm over the last axis of an (M, C) array (channels_last)."""
    M, C = x2d.shape
    align = _sublane_align(x2d.dtype)
    bsize = _budget_itemsize(x2d.dtype)

    if 0 < C < 128 and 128 % C == 0:
        return _layer_norm_rows_packed(x2d, weight, bias, eps)

    # General path: rows of width C on the lane axis.  Budget against the
    # lane-padded, f32-equivalent row so VMEM never blows up.
    # TODO(synk): C not dividing 128 (e.g. 96) still pays partially masked
    # lanes; a W = lcm(C, 128) packed layout would cover it.
    row_bytes = pl.cdiv(C, 128) * 128 * bsize
    tm = _row_tile(M, row_bytes, align)
    grid = (pl.cdiv(M, tm),)
    kernel = functools.partial(_ln_rows_kernel, eps=eps)
    return pl.pallas_call(
        kernel,
        out_shape=jax.ShapeDtypeStruct((M, C), x2d.dtype),
        grid_spec=pltpu.PrefetchScalarGridSpec(
            num_scalar_prefetch=0,
            grid=grid,
            in_specs=[
                pl.BlockSpec((tm, C), lambda i: (i, 0)),
                pl.BlockSpec((1, C), lambda i: (0, 0)),
                pl.BlockSpec((1, C), lambda i: (0, 0)),
            ],
            out_specs=pl.BlockSpec((tm, C), lambda i: (i, 0)),
        ),
        compiler_params=_compiler_params(1),
    )(x2d, weight.reshape(1, C), bias.reshape(1, C))


def _layer_norm_nchw(x, weight, bias, eps):
    """channels_first LayerNorm, NCHW-native (no transposes)."""
    N, C, H, Wd = x.shape
    L = H * Wd
    x3 = x.reshape(N, C, L)                            # free row-major view
    align = _sublane_align(x.dtype)
    bsize = _budget_itemsize(x.dtype)
    c_pad = pl.cdiv(C, align) * align                  # VMEM sublane padding

    if L <= 128:
        tl = L                                         # full extent: legal
        nl = 1
    else:
        padded_l = pl.cdiv(L, 128) * 128
        # Budget by HBM payload (C*tl), cap by the sublane-padded VMEM footprint,
        # and keep the total grid at >= _MIN_GRID_STEPS steps.
        tl_payload = max(128, (_TARGET_BLOCK_BYTES // max(C * bsize, 1)) // 128 * 128)
        tl_vmem = max(128, (_VMEM_BLOCK_CAP_BYTES // max(c_pad * bsize, 1)) // 128 * 128)
        want_l_steps = max(1, pl.cdiv(_MIN_GRID_STEPS, N))
        tl_steps = max(128, pl.cdiv(pl.cdiv(L, want_l_steps), 128) * 128)
        tl = min(tl_payload, tl_vmem, tl_steps, padded_l)
        nl = pl.cdiv(L, tl)

    # Larger extent leads the (parallel) grid for a balanced megacore split.
    if nl >= N:
        grid = (nl, N)
        xmap = lambda l, n: (n, 0, l)
    else:
        grid = (N, nl)
        xmap = lambda n, l: (n, 0, l)
    cmap = lambda *_: (0, 0, 0)

    w3 = weight.reshape(1, C, 1)
    b3 = bias.reshape(1, C, 1)
    kernel = functools.partial(_ln_nchw_kernel, eps=eps)
    y = pl.pallas_call(
        kernel,
        out_shape=jax.ShapeDtypeStruct((N, C, L), x.dtype),
        grid_spec=pltpu.PrefetchScalarGridSpec(
            num_scalar_prefetch=0,
            grid=grid,
            in_specs=[
                pl.BlockSpec((1, C, tl), xmap),
                pl.BlockSpec((1, C, 1), cmap),
                pl.BlockSpec((1, C, 1), cmap),
            ],
            out_specs=pl.BlockSpec((1, C, tl), xmap),
        ),
        compiler_params=_compiler_params(2),
    )(x3, w3, b3)
    return y.reshape(N, C, H, Wd)


def layer_norm(x, weight, bias, eps=1e-6, data_format="channels_last"):
    """Matches the PyTorch ConvNeXt-style LayerNorm module forward.

    channels_first: x is NCHW, normalize over axis 1.
    channels_last : x is (..., C), normalize over the last axis (F.layer_norm).
    """
    if data_format == "channels_first":
        return _layer_norm_nchw(x, weight, bias, eps)
    elif data_format == "channels_last":
        C = x.shape[-1]
        orig_shape = x.shape
        y = _layer_norm_rows(x.reshape(-1, C), weight, bias, eps)
        return y.reshape(orig_shape)
    else:
        raise NotImplementedError


# ---------------------------------------------------------------------------
# Pure-JAX references (match the PyTorch module exactly)
# ---------------------------------------------------------------------------

def _reference_channels_first(x, weight, bias, eps):
    u = jnp.mean(x, axis=1, keepdims=True)
    s = jnp.mean((x - u) ** 2, axis=1, keepdims=True)
    xn = (x - u) / jnp.sqrt(s + eps)
    return weight[None, :, None, None] * xn + bias[None, :, None, None]


def _reference_channels_last(x, weight, bias, eps):
    u = jnp.mean(x, axis=-1, keepdims=True)
    s = jnp.mean((x - u) ** 2, axis=-1, keepdims=True)
    xn = (x - u) / jnp.sqrt(s + eps)
    return weight * xn + bias


if __name__ == "__main__":
    key = jax.random.PRNGKey(0)
    eps = 1e-6
    k1, k2, k3, k4, k5, k6 = jax.random.split(key, 6)

    # --- channels_first (NCHW), C=4: NCHW-native kernel ---
    N, C, H, W = 2, 4, 16, 16
    weight = 1.0 + 0.1 * jax.random.normal(k1, (C,), dtype=jnp.float32)
    bias = 0.1 * jax.random.normal(k2, (C,), dtype=jnp.float32)
    x_cf = jax.random.normal(k3, (N, C, H, W), dtype=jnp.float32)
    out_cf = jax.block_until_ready(
        layer_norm(x_cf, weight, bias, eps, "channels_first"))
    ref_cf = _reference_channels_first(x_cf, weight, bias, eps)
    assert out_cf.shape == (N, C, H, W)
    assert jnp.max(jnp.abs(out_cf - ref_cf)) < 1e-4

    # --- channels_last, C=4: lane-dense packed path (M divisible by g) ---
    x_cl = jax.random.normal(k4, (N, H, W, C), dtype=jnp.float32)
    out_cl = jax.block_until_ready(
        layer_norm(x_cl, weight, bias, eps, "channels_last"))
    ref_cl = _reference_channels_last(x_cl, weight, bias, eps)
    assert out_cl.shape == (N, H, W, C)
    assert jnp.max(jnp.abs(out_cl - ref_cl)) < 1e-4

    # --- channels_last, C=4, M % g != 0: packed path with row padding ---
    x_cl_odd = jax.random.normal(k6, (1, 5, 5, C), dtype=jnp.float32)
    out_cl_odd = jax.block_until_ready(
        layer_norm(x_cl_odd, weight, bias, eps, "channels_last"))
    ref_cl_odd = _reference_channels_last(x_cl_odd, weight, bias, eps)
    assert out_cl_odd.shape == (1, 5, 5, C)
    assert jnp.max(jnp.abs(out_cl_odd - ref_cl_odd)) < 1e-4

    # --- channels_last, C=96: general row path ---
    C2 = 96
    w2 = 1.0 + 0.1 * jax.random.normal(k1, (C2,), dtype=jnp.float32)
    b2 = 0.1 * jax.random.normal(k2, (C2,), dtype=jnp.float32)
    x_cl2 = jax.random.normal(k5, (2, 8, 8, C2), dtype=jnp.float32)
    out_cl2 = jax.block_until_ready(
        layer_norm(x_cl2, w2, b2, eps, "channels_last"))
    ref_cl2 = _reference_channels_last(x_cl2, w2, b2, eps)
    assert out_cl2.shape == (2, 8, 8, C2)
    assert jnp.max(jnp.abs(out_cl2 - ref_cl2)) < 1e-4

    print("KERNEL_OK")
</pallas_src>

<mosaic_0001>
module attributes {stable_mosaic.version = 11 : i64} {
  func.func @_ln_nchw_kernel(%arg0: i32, %arg1: i32, %arg2: memref<1x4x128xf32, #tpu.memory_space<vmem>>, %arg3: memref<1x4x1xf32, #tpu.memory_space<vmem>>, %arg4: memref<1x4x1xf32, #tpu.memory_space<vmem>>, %arg5: memref<1x4x128xf32, #tpu.memory_space<vmem>>) attributes {dimension_semantics = [#tpu.dimension_semantics<parallel>, #tpu.dimension_semantics<parallel>], iteration_bounds = array<i64: 2, 2>, scalar_prefetch = 0 : i64, scratch_operands = 0 : i64, tpu.core_type = #tpu.core_type<tc>, window_params = [{transform_indices = @transform_0, window_bounds = array<i64: 1, 4, 128>}, {pipeline_mode = #tpu.pipeline_mode<synchronous>, transform_indices = @transform_1, window_bounds = array<i64: 1, 4, 1>}, {pipeline_mode = #tpu.pipeline_mode<synchronous>, transform_indices = @transform_2, window_bounds = array<i64: 1, 4, 1>}, {transform_indices = @transform_3, window_bounds = array<i64: 1, 4, 128>}]} {
    %c0 = arith.constant 0 : index
    %c0_0 = arith.constant 0 : index
    %c0_1 = arith.constant 0 : index
    %0 = vector.load %arg2[%c0, %c0_0, %c0_1] : memref<1x4x128xf32, #tpu.memory_space<vmem>>, vector<1x4x128xf32>
    %cst = arith.constant dense<0.000000e+00> : vector<1x128xf32>
    %1 = vector.multi_reduction <add>, %0, %cst [1] : vector<1x4x128xf32> to vector<1x128xf32>
    %2 = vector.shape_cast %1 : vector<1x128xf32> to vector<1x1x128xf32>
    %cst_2 = arith.constant 4.000000e+00 : f32
    %3 = vector.broadcast %cst_2 : f32 to vector<1x1x128xf32>
    %4 = arith.divf %2, %3 : vector<1x1x128xf32>
    %5 = arith.mulf %0, %0 : vector<1x4x128xf32>
    %cst_3 = arith.constant dense<0.000000e+00> : vector<1x128xf32>
    %6 = vector.multi_reduction <add>, %5, %cst_3 [1] : vector<1x4x128xf32> to vector<1x128xf32>
    %7 = vector.shape_cast %6 : vector<1x128xf32> to vector<1x1x128xf32>
    %cst_4 = arith.constant 4.000000e+00 : f32
    %8 = vector.broadcast %cst_4 : f32 to vector<1x1x128xf32>
    %9 = arith.divf %7, %8 : vector<1x1x128xf32>
    %10 = arith.mulf %4, %4 : vector<1x1x128xf32>
    %11 = arith.subf %9, %10 : vector<1x1x128xf32>
    %12 = vector.broadcast %4 : vector<1x1x128xf32> to vector<1x4x128xf32>
    %13 = arith.subf %0, %12 : vector<1x4x128xf32>
    %cst_5 = arith.constant 9.99999997E-7 : f32
    %14 = vector.broadcast %cst_5 : f32 to vector<1x1x128xf32>
    %15 = arith.addf %11, %14 : vector<1x1x128xf32>
    %16 = math.rsqrt %15 : vector<1x1x128xf32>
    %17 = vector.broadcast %16 : vector<1x1x128xf32> to vector<1x4x128xf32>
    %18 = arith.mulf %13, %17 : vector<1x4x128xf32>
    %c0_6 = arith.constant 0 : index
    %c0_7 = arith.constant 0 : index
    %c0_8 = arith.constant 0 : index
    %19 = vector.load %arg3[%c0_6, %c0_7, %c0_8] : memref<1x4x1xf32, #tpu.memory_space<vmem>>, vector<1x4x1xf32>
    %20 = vector.broadcast %19 : vector<1x4x1xf32> to vector<1x4x128xf32>
    %21 = arith.mulf %18, %20 : vector<1x4x128xf32>
    %c0_9 = arith.constant 0 : index
    %c0_10 = arith.constant 0 : index
    %c0_11 = arith.constant 0 : index
    %22 = vector.load %arg4[%c0_9, %c0_10, %c0_11] : memref<1x4x1xf32, #tpu.memory_space<vmem>>, vector<1x4x1xf32>
    %23 = vector.broadcast %22 : vector<1x4x1xf32> to vector<1x4x128xf32>
    %24 = arith.addf %21, %23 : vector<1x4x128xf32>
    %c0_12 = arith.constant 0 : index
    %c0_13 = arith.constant 0 : index
    %c0_14 = arith.constant 0 : index
    %25 = vector.load %arg5[%c0_12, %c0_13, %c0_14] : memref<1x4x128xf32, #tpu.memory_space<vmem>>, vector<1x4x128xf32>
    tpu.vector_store %arg5[%c0_12, %c0_13, %c0_14], %24 {strides = array<i32>} : memref<1x4x128xf32, #tpu.memory_space<vmem>>, vector<1x4x128xf32>,
    return
  }
  func.func @transform_0(%arg0: i32, %arg1: i32) -> (i32, i32, i32) {
    %c0_i32 = arith.constant 0 : i32
    %c0_i32_0 = arith.constant 0 : i32
    return %arg1, %c0_i32, %arg0 : i32, i32, i32
  }
  func.func @transform_1(%arg0: i32, %arg1: i32) -> (i32, i32, i32) {
    %c0_i32 = arith.constant 0 : i32
    %c0_i32_0 = arith.constant 0 : i32
    %c0_i32_1 = arith.constant 0 : i32
    %c0_i32_2 = arith.constant 0 : i32
    return %c0_i32, %c0_i32_0, %c0_i32_1 : i32, i32, i32
  }
  func.func @transform_2(%arg0: i32, %arg1: i32) -> (i32, i32, i32) {
    %c0_i32 = arith.constant 0 : i32
    %c0_i32_0 = arith.constant 0 : i32
    %c0_i32_1 = arith.constant 0 : i32
    %c0_i32_2 = arith.constant 0 : i32
    return %c0_i32, %c0_i32_0, %c0_i32_1 : i32, i32, i32
  }
  func.func @transform_3(%arg0: i32, %arg1: i32) -> (i32, i32, i32) {
    %c0_i32 = arith.constant 0 : i32
    %c0_i32_0 = arith.constant 0 : i32
    return %arg1, %c0_i32, %arg0 : i32, i32, i32
  }
}

</mosaic_0001>

<llo_original>
// kernel: tpu_custom_call.1
$region0: #{tpu_custom_call.1}
  #allocation0 [shape = 'u32[]', space=smem, size = 0x4, offset = 0x4, fixed_abs, tag = 'smem constant byte address 0x4 - core index']
  #allocation1 [shape = 'u32[72,128]{1,0:T(1,128)}', space=vmem, size = 0x9000, scoped, tag = 'internal scratch']
  %s0 = inlined_call_operand.hbm [shape: f32[2,4,256], index: 0, kind: input, shape index: {}]
  %s1 = inlined_call_operand.vmem [shape: f32[1,4,1], index: 1, kind: input, shape index: {}]
  %s2 = inlined_call_operand.vmem [shape: f32[1,4,1], index: 2, kind: input, shape index: {}]
  %s3 = inlined_call_operand.hbm [shape: f32[2,4,256], index: 3, kind: output, shape index: {}]
  %s4 = sld [smem:[#allocation0]]
  $region49: #{tpu_custom_call.1} parent=0
    _
  %s6 = ssub.s32 1, %s4
  %s7 = scalar_select 0, %s6, %s4
  $region1: #{tpu_custom_call.1} parent=0
    #allocation2 [shape = 'u8[4096]{0}', space=vmem, size = 0x1000, scoped, tag = 'input window, operand 0']
    #allocation3 [shape = 's32[2]{0}', space=sflag, size = 0x8, scoped, tag = 'scoped memory for tpu_custom_call.1']
    #allocation4 [shape = 's32[2]{0}', space=sflag, size = 0x8, scoped, tag = 'scoped memory for tpu_custom_call.1']
    #allocation5 [shape = 'u8[4096]{0}', space=vmem, size = 0x1000, scoped, tag = 'output window, operand 0']
    %8 = vsyncpa [#allocation3], 0
    %s9 = scalar_lea.sflag [#allocation3], 1
    %10 = vsyncpa %s9, 0
    %11 = vsyncpa [#allocation4], 0
    %s12 = scalar_lea.sflag [#allocation4], 1
    %13 = vsyncpa %s12, 0
    loop: start=0, step=1, limit=6
    $region2: #{tpu_custom_call.1} parent=1 // loop_pre_header
      _
    $region3: #{tpu_custom_call.1} parent=1 // loop_header
      %s15 = sphi 0, %s19
      %p16 = scmp.ge.s32.totalorder %s15, 6
      %s22 = sphi 0, %s34
      %s23 = sphi 0, %s30
      %s24 = sphi 0, %s22
      %s25 = sphi 0, %s23
      %s26 = sphi 0, %s24
      %s27 = sphi 0, %s25
      %s39 = sphi 0, %s41
      %s42 = sphi 0, %s39
      %s43 = sphi 0, %s42
      %s59 = sphi 0, %s43
      %s63 = sphi 0, %s63
      %s65 = sphi 0, %s63
      %s66 = sphi 0, %s65
      %s80 = sphi 0, %s66
      %s84 = sphi 0, %s84
      %s86 = sphi 0, %s84
      %s87 = sphi 0, %s86
      %s101 = sphi 0, %s87
      %s109 = sphi 0, %s111
      %s112 = sphi 0, %s109
      %s113 = sphi 0, %s112
      %s129 = sphi 0, %s113
    $region4: #{tpu_custom_call.1} parent=1 // loop_header_branch
      %18 = sbr.rel (%p16) target = $region8
    $region5: #{tpu_custom_call.1} parent=1 // loop_body
      %s20 = ssub.s32 %s15, 1
      %s21 = ssub.s32 %s15, 2
      %s28 = sadd.s32 1, %s23
      %p29 = scmp.ge.s32.totalorder %s28, 2
      %s30 = scalar_select %p29, 0, %s28
      %s31 = sadd.s32 1, %s22
      %s32 = scalar_select %p29, %s31, %s22
      %p33 = scmp.ge.s32.totalorder %s32, 2
      %s34 = scalar_select %p33, 0, %s32
      %s35 = ssub.s32 %s23, %s30
      %s36 = ssub.s32 %s22, %s34
      %s37 = sor.u32 %s35, %s36
      %p38 = scmp.eq.s32.totalorder %s37, 0
      %s40 = sadd.s32 %s39, 1
      %s41 = scalar_select %p38, %s39, %s40
      %p44 = pneg %p38
      %p45 = scmp.eq.s32.totalorder %s15, 3
      %p46 = por %p44, %p45
      %p47 = scmp.ne.s32.totalorder %s39, %s42
      %p48 = scmp.eq.s32.totalorder %s15, 0
      %p49 = por %p47, %p48
      %p50 = scmp.ne.s32.totalorder %s39, %s42
      %p51 = scmp.eq.s32.totalorder %s20, 3
      %p52 = por %p50, %p51
      %p53 = scmp.ne.s32.totalorder %s42, %s43
      %p54 = scmp.eq.s32.totalorder %s20, 0
      %p55 = por %p53, %p54
      %p56 = scmp.ne.s32.totalorder %s42, %s43
      %p57 = scmp.eq.s32.totalorder %s21, 3
      %p58 = por %p56, %p57
      %p60 = scmp.ne.s32.totalorder %s43, %s59
      %p61 = scmp.eq.s32.totalorder %s21, 0
      %p62 = por %p60, %p61
      %s64 = sadd.s32 %s63, 1
      %p67 = scmp.eq.s32.totalorder %s15, 3
      %p68 = scmp.ne.s32.totalorder %s63, %s65
      %p69 = scmp.eq.s32.totalorder %s15, 0
      %p70 = por %p68, %p69
      %p71 = scmp.ne.s32.totalorder %s63, %s65
      %p72 = scmp.eq.s32.totalorder %s20, 3
      %p73 = por %p71, %p72
      %p74 = scmp.ne.s32.totalorder %s65, %s66
      %p75 = scmp.eq.s32.totalorder %s20, 0
      %p76 = por %p74, %p75
      %p77 = scmp.ne.s32.totalorder %s65, %s66
      %p78 = scmp.eq.s32.totalorder %s21, 3
      %p79 = por %p77, %p78
      %p81 = scmp.ne.s32.totalorder %s66, %s80
      %p82 = scmp.eq.s32.totalorder %s21, 0
      %p83 = por %p81, %p82
      %s85 = sadd.s32 %s84, 1
      %p88 = scmp.eq.s32.totalorder %s15, 3
      %p89 = scmp.ne.s32.totalorder %s84, %s86
      %p90 = scmp.eq.s32.totalorder %s15, 0
      %p91 = por %p89, %p90
      %p92 = scmp.ne.s32.totalorder %s84, %s86
      %p93 = scmp.eq.s32.totalorder %s20, 3
      %p94 = por %p92, %p93
      %p95 = scmp.ne.s32.totalorder %s86, %s87
      %p96 = scmp.eq.s32.totalorder %s20, 0
      %p97 = por %p95, %p96
      %p98 = scmp.ne.s32.totalorder %s86, %s87
      %p99 = scmp.eq.s32.totalorder %s21, 3
      %p100 = por %p98, %p99
      %p102 = scmp.ne.s32.totalorder %s87, %s101
      %p103 = scmp.eq.s32.totalorder %s21, 0
      %p104 = por %p102, %p103
      %s105 = ssub.s32 %s23, %s30
      %s106 = ssub.s32 %s22, %s34
      %s107 = sor.u32 %s105, %s106
      %p108 = scmp.eq.s32.totalorder %s107, 0
      %s110 = sadd.s32 %s109, 1
      %s111 = scalar_select %p108, %s109, %s110
      %p114 = pneg %p108
      %p115 = scmp.eq.s32.totalorder %s15, 3
      %p116 = por %p114, %p115
      %p117 = scmp.ne.s32.totalorder %s109, %s112
      %p118 = scmp.eq.s32.totalorder %s15, 0
      %p119 = por %p117, %p118
      %p120 = scmp.ne.s32.totalorder %s109, %s112
      %p121 = scmp.eq.s32.totalorder %s20, 3
      %p122 = por %p120, %p121
      %p123 = scmp.ne.s32.totalorder %s112, %s113
      %p124 = scmp.eq.s32.totalorder %s20, 0
      %p125 = por %p123, %p124
      %p126 = scmp.ne.s32.totalorder %s112, %s113
      %p127 = scmp.eq.s32.totalorder %s21, 3
      %p128 = por %p126, %p127
      %p130 = scmp.ne.s32.totalorder %s113, %s129
      %p131 = scmp.eq.s32.totalorder %s21, 0
      %p132 = por %p130, %p131
      %p133 = scmp.le.s32.totalorder 1, %s15
      %p134 = scmp.lt.s32.totalorder %s15, 5
      %p135 = pnand %p133, %p134
      %p136 = pneg %p135
      // Predicated region
      $region9: #{tpu_custom_call.1} parent=5 // pred_check
        _
      $region10: #{tpu_custom_call.1} parent=5 // pred_check_branch
        %138 = sbr.rel (%p135) target = $region12
      $region11: #{tpu_custom_call.1} parent=5 // pred_region
        %s139 = ssub.s32 %s15, 1
        // Predicated region
        $region13: #{tpu_custom_call.1} parent=11 // pred_check
          %p140 = pneg %p76
        $region14: #{tpu_custom_call.1} parent=11 // pred_check_branch
          %142 = sbr.rel (%p140) target = $region16
        $region15: #{tpu_custom_call.1} parent=11 // pred_region
          _
        $region16: #{tpu_custom_call.1} parent=11 // pred_fallthru
          _
        // Predicated region
        $region17: #{tpu_custom_call.1} parent=11 // pred_check
          %p143 = pneg %p97
        $region18: #{tpu_custom_call.1} parent=11 // pred_check_branch
          %145 = sbr.rel (%p143) target = $region20
        $region19: #{tpu_custom_call.1} parent=11 // pred_region
          _
        $region20: #{tpu_custom_call.1} parent=11 // pred_fallthru
          _
      $region12: #{tpu_custom_call.1} parent=5 // pred_fallthru
        _
      %p146 = scmp.lt.s32.totalorder %s15, 4
      // Predicated region
      $region21: #{tpu_custom_call.1} parent=5 // pred_check
        %p147 = pneg %p146
      $region22: #{tpu_custom_call.1} parent=5 // pred_check_branch
        %149 = sbr.rel (%p147) target = $region24
      $region23: #{tpu_custom_call.1} parent=5 // pred_region
        // Predicated region
        $region25: #{tpu_custom_call.1} parent=23 // pred_check
          %p150 = pneg %p49
        $region26: #{tpu_custom_call.1} parent=23 // pred_check_branch
          %152 = sbr.rel (%p150) target = $region28
        $region27: #{tpu_custom_call.1} parent=23 // pred_region
          %s153 = sand.u32 %s39, 1
          %s154 = scalar_lea.sflag [#allocation3], %s153
          %s155 = sand.u32 %s39, 1
          %s156 = smul.addr %s155, 4
          %s157 = scalar_lea.vmem [#allocation2], %s156
          %159 = vsyncadd %s154, 0
          %s160 = smul.addr %s23, 2
          %s161 = sadd.s32 %s22, %s160
          %s162 = smul.addr %s161, 4
          %s163 = scalar_lea.hbm %s0, %s162
          %s165 = sshll.u32 %s163, 4
          %s166 = int_to_ptr.hbm [resolvable:$true] %s165
          %s167 = sshll.u32 %s157, 4
          %s168 = int_to_ptr.vmem [resolvable:$true] %s167
          %170 = dma.hbm_to_vmem [thread:$0]  %s166, 64, %s168, %s154
        $region28: #{tpu_custom_call.1} parent=23 // pred_fallthru
          _
      $region24: #{tpu_custom_call.1} parent=5 // pred_fallthru
        _
      %p171 = scmp.le.s32.totalorder 1, %s15
      %p172 = scmp.lt.s32.totalorder %s15, 5
      %p173 = pnand %p171, %p172
      %p174 = pneg %p173
      // Predicated region
      $region29: #{tpu_custom_call.1} parent=5 // pred_check
        _
      $region30: #{tpu_custom_call.1} parent=5 // pred_check_branch
        %176 = sbr.rel (%p173) target = $region32
      $region31: #{tpu_custom_call.1} parent=5 // pred_region
        %s177 = ssub.s32 %s15, 1
        %s178 = sand.u32 %s42, 1
        %s179 = scalar_lea.sflag [#allocation3], %s178
        %s180 = sand.u32 %s42, 1
        %s181 = smul.addr %s180, 4
        %s182 = scalar_lea.vmem [#allocation2], %s181
        // Predicated region
        $region33: #{tpu_custom_call.1} parent=31 // pred_check
          %p183 = pneg %p55
        $region34: #{tpu_custom_call.1} parent=31 // pred_check_branch
          %185 = sbr.rel (%p183) target = $region36
        $region35: #{tpu_custom_call.1} parent=31 // pred_region
          %187 = dma.done %s179, 64
        $region36: #{tpu_custom_call.1} parent=31 // pred_fallthru
          _
        %s188 = sand.u32 %s42, 1
        %s189 = scalar_lea.sflag [#allocation3], %s188
        %s190 = sand.u32 %s42, 1
        %s191 = smul.addr %s190, 4
        %s192 = scalar_lea.vmem [#allocation2], %s191
        %p193 = pneg %p55
        %p194 = pneg %p52
        %p195 = pneg %p76
        %p196 = pneg %p73
        %p197 = pneg %p97
        %p198 = pneg %p94
        %p199 = pneg %p125
        %p200 = pneg %p122
        %s201 = sand.u32 %s112, 1
        %s202 = scalar_lea.sflag [#allocation4], %s201
        %s203 = sand.u32 %s112, 1
        %s204 = smul.addr %s203, 4
        %s205 = scalar_lea.vmem [#allocation5], %s204
        %v206 = vld [vmem:[%s182] sm:$0xf]
        %vm207 = vcmask 1043456
        %v208 = vsel %vm207, %v206, 0.0
        %v209 = vrot.slane %v208, 4
        %v210 = vadd.f32 %v208, %v209
        %v211 = vrot.slane %v210, 2
        %v212 = vadd.f32 %v210, %v211
        %v213 = vrot.slane %v212, 1
        %v214 = vadd.f32 %v212, %v213
        %v215 = vrcp.pop 4.0
        %v216 = vmul.f32 4.0, %v215
        %v217 = vsub.f32 1.0, %v216
        %v218 = vmul.f32 %v215, %v217
        %v219 = vadd.f32 %v215, %v218
        %vm220 = vweird.f32 %v215
        %v221 = vsel %vm220, %v215, %v219
        %v222 = vmul.f32 %v214, %v221
        %v223 = vmul.f32 %v206, %v206
        %v224 = vsel %vm207, %v223, 0.0
        %v225 = vrot.slane %v224, 4
        %v226 = vadd.f32 %v224, %v225
        %v227 = vrot.slane %v226, 2
        %v228 = vadd.f32 %v226, %v227
        %v229 = vrot.slane %v228, 1
        %v230 = vadd.f32 %v228, %v229
        %v231 = vmul.f32 %v230, %v221
        %v232 = vmul.f32 %v222, %v222
        %v233 = vsub.f32 %v231, %v232
        %v234 = vsub.f32 %v206, %v222
        %v235 = vadd.f32 %v233, 1e-06
        %v236 = vrsqrt.pop %v235
        %v237 = vmul.f32 %v236, %v235
        %v238 = vmul.f32 %v237, %v236
        %v239 = vmul.f32 0.5, %v238
        %v240 = vsub.f32 1.5, %v239
        %v241 = vmul.f32 %v236, %v240
        %vm242 = vweird.f32 %v235
        %vm243 = vweird.f32 %v236
        %vm244 = vmor %vm242, %vm243
        %v245 = vsel %vm244, %v236, %v241
        %v246 = vmul.f32 %v234, %v245
        %v247 = vld [vmem:[%s1] sm:$0xf]
        %249 = vset.pattern.permute.xlu0 0
        %250 = vperm.xlu0 %249, %v247
        %v251 = vpop.permute.xlu0 %250
        %v253 = vmul.f32 %v246, %v251
        %v254 = vld [vmem:[%s2] sm:$0xf]
        %256 = vset.pattern.permute.xlu0 0
        %257 = vperm.xlu0 %256, %v254
        %v258 = vpop.permute.xlu0 %257
        %v260 = vadd.f32 %v253, %v258
        %261 = vst [vmem:[%s205] sm:$0xf] %v260
        %s262 = sand.u32 %s112, 1
        %s263 = scalar_lea.sflag [#allocation4], %s262
        %s264 = sand.u32 %s112, 1
        %s265 = smul.addr %s264, 4
        %s266 = scalar_lea.vmem [#allocation5], %s265
        // Predicated region
        $region37: #{tpu_custom_call.1} parent=31 // pred_check
          %p267 = pneg %p122
        $region38: #{tpu_custom_call.1} parent=31 // pred_check_branch
          %269 = sbr.rel (%p267) target = $region40
        $region39: #{tpu_custom_call.1} parent=31 // pred_region
          %271 = vsyncadd %s263, 0
          %s272 = smul.addr %s25, 2
          %s273 = sadd.s32 %s24, %s272
          %s274 = smul.addr %s273, 4
          %s275 = scalar_lea.hbm %s3, %s274
          %s277 = sshll.u32 %s266, 4
          %s278 = int_to_ptr.vmem [resolvable:$true] %s277
          %s279 = sshll.u32 %s275, 4
          %s280 = int_to_ptr.hbm [resolvable:$true] %s279
          %282 = dma.vmem_to_hbm [thread:$0]  %s278, 64, %s280, %s263
        $region40: #{tpu_custom_call.1} parent=31 // pred_fallthru
          _
      $region32: #{tpu_custom_call.1} parent=5 // pred_fallthru
        _
      %p283 = scmp.le.s32.totalorder 2, %s15
      // Predicated region
      $region41: #{tpu_custom_call.1} parent=5 // pred_check
        %p284 = pneg %p283
      $region42: #{tpu_custom_call.1} parent=5 // pred_check_branch
        %286 = sbr.rel (%p284) target = $region44
      $region43: #{tpu_custom_call.1} parent=5 // pred_region
        %s287 = ssub.s32 %s15, 2
        // Predicated region
        $region45: #{tpu_custom_call.1} parent=43 // pred_check
          %p288 = pneg %p128
        $region46: #{tpu_custom_call.1} parent=43 // pred_check_branch
          %290 = sbr.rel (%p288) target = $region48
        $region47: #{tpu_custom_call.1} parent=43 // pred_region
          %s291 = sand.u32 %s113, 1
          %s292 = scalar_lea.sflag [#allocation4], %s291
          %s293 = sand.u32 %s113, 1
          %s294 = smul.addr %s293, 4
          %s295 = scalar_lea.vmem [#allocation5], %s294
          %297 = dma.done %s292, 64
        $region48: #{tpu_custom_call.1} parent=43 // pred_fallthru
          _
      $region44: #{tpu_custom_call.1} parent=5 // pred_fallthru
        _
    $region6: #{tpu_custom_call.1} parent=1 // loop_footer
      %s19 = sadd.s32 1, %s15
    $region7: #{tpu_custom_call.1} parent=1 // loop_footer_branch
      %14 = sbr.rel target = $region3
    $region8: #{tpu_custom_call.1} parent=1 // loop_exit
      _
    %298 = vsyncpa [#allocation3], 1
    %s299 = scalar_lea.sflag [#allocation3], 1
    %300 = vsyncpa %s299, 1
    %301 = vsyncpa [#allocation4], 1
    %s302 = scalar_lea.sflag [#allocation4], 1
    %303 = vsyncpa %s302, 1

</llo_original>
